<compile_context>
chip_gen: v7x
topology: tpu7x:2x2x1
jax: 0.10.0
libtpu: 0.0.40
codegen_flags: <defaults>
</compile_context>

<pallas_src>
import math
from functools import partial

import jax
import jax.numpy as jnp
from jax import lax
from jax.experimental import pallas as pl
from jax.experimental.pallas import tpu as pltpu

_LANES = 128


def _sgam_kernel(xq_ref, xk_ref, wqt_ref, bq_ref, wkt_ref, bk_ref, a_ref, *,
                 bs, num_ocr, top_kp):
    # Q/K projections for ALL batches as two single matmuls (batch folded into
    # rows). Weights arrive pre-transposed to (in, out) layout; Q weights/bias
    # are pre-scaled by 1/sqrt(D).
    q = jnp.dot(xq_ref[...], wqt_ref[...],
                preferred_element_type=jnp.float32) + bq_ref[...]
    k = jnp.dot(xk_ref[...], wkt_ref[...],
                preferred_element_type=jnp.float32) + bk_ref[...]

    # Batched attention A[b] = Q[b] @ K[b]^T. dot_general contracts the
    # trailing feature dim of both operands (no XLU transpose). BS is small
    # and static -> unrolled Python loop; slices are static and aligned.
    for b in range(bs):
        qb = q[b * num_ocr:(b + 1) * num_ocr, :]
        kb = k[b * top_kp:(b + 1) * top_kp, :]
        ab = lax.dot_general(qb, kb, (((1,), (1,)), ((), ())),
                             preferred_element_type=jnp.float32)
        a_ref[b] = ab.astype(a_ref.dtype)   # (num_ocr, top_kp) lane-dense store


def semantic_attention_sgam(xq, xk, wq, bq, wk, bk):
    """SemanticAttentionSgAM.forward.

    xq: (BS, num_ocr, D) fasttext_ocr_tokens
    xk: (BS, top_K, D)   fasttext_object_concepts
    wq, wk: (D, D) nn.Linear weights (out, in); bq, bk: (D,)
    Returns A: (BS, num_ocr, top_K) float32.
    """
    bs, num_ocr, d = xq.shape
    _, top_k, _ = xk.shape
    assert xk.shape[2] == d and wq.shape == (d, d) and wk.shape == (d, d)

    # Host-side (one-time): fold 1/sqrt(D) into the Q projection and
    # pre-transpose both weights to (in, out) layout.
    scale = 1.0 / math.sqrt(d)
    wqt = (wq * scale).T.astype(jnp.float32)             # (in, out), prescaled
    bq2 = (bq * scale).reshape(1, d).astype(jnp.float32)
    wkt = wk.T.astype(jnp.float32)                       # (in, out)
    bk2 = bk.reshape(1, d).astype(jnp.float32)

    # Lane-dense output: pad top_K up to a multiple of 128 lanes (pad K rows
    # with zeros; padded columns of A are sliced off after the call).
    top_kp = ((top_k + _LANES - 1) // _LANES) * _LANES
    if top_kp != top_k:
        xk = jnp.pad(xk, ((0, 0), (0, top_kp - top_k), (0, 0)))

    # Fold batch into rows so each projection is one big matmul.
    xq_flat = xq.reshape(bs * num_ocr, d)
    xk_flat = xk.reshape(bs * top_kp, d)

    kernel = partial(_sgam_kernel, bs=bs, num_ocr=num_ocr, top_kp=top_kp)

    a_pad = pl.pallas_call(
        kernel,
        out_shape=jax.ShapeDtypeStruct((bs, num_ocr, top_kp), jnp.float32),
        grid_spec=pltpu.PrefetchScalarGridSpec(
            num_scalar_prefetch=0,
            grid=(1,),  # everything fits in VMEM -> one step, zero pipeline overhead
            in_specs=[
                pl.BlockSpec((bs * num_ocr, d), lambda i: (0, 0)),   # x_q (batch-folded)
                pl.BlockSpec((bs * top_kp, d), lambda i: (0, 0)),    # x_k (batch-folded, padded)
                pl.BlockSpec((d, d), lambda i: (0, 0)),              # Wq^T * scale
                pl.BlockSpec((1, d), lambda i: (0, 0)),              # bq * scale
                pl.BlockSpec((d, d), lambda i: (0, 0)),              # Wk^T
                pl.BlockSpec((1, d), lambda i: (0, 0)),              # bk
            ],
            out_specs=pl.BlockSpec((bs, num_ocr, top_kp), lambda i: (0, 0, 0)),
        ),
        compiler_params=pltpu.CompilerParams(
            dimension_semantics=("arbitrary",),
        ),
    )(xq_flat, xk_flat, wqt, bq2, wkt, bk2)

    return a_pad[:, :, :top_k] if top_kp != top_k else a_pad


def _init_linear(key, in_features, out_features):
    # Deterministic nn.Linear-style init: U(-1/sqrt(in), 1/sqrt(in))
    kw, kb = jax.random.split(key)
    bound = 1.0 / math.sqrt(in_features)
    w = jax.random.uniform(kw, (out_features, in_features), jnp.float32, -bound, bound)
    b = jax.random.uniform(kb, (out_features,), jnp.float32, -bound, bound)
    return w, b


if __name__ == "__main__":
    # Small shapes consistent with the module (fasttext_dim plays the role of 300).
    BS, NUM_OCR, TOP_K, D = 2, 8, 16, 32

    key = jax.random.PRNGKey(0)
    k_xq, k_xk, k_q, k_k = jax.random.split(key, 4)

    fasttext_ocr_tokens = jax.random.normal(k_xq, (BS, NUM_OCR, D), jnp.float32)
    fasttext_object_concepts = jax.random.normal(k_xk, (BS, TOP_K, D), jnp.float32)

    wq, bq = _init_linear(k_q, D, D)
    wk, bk = _init_linear(k_k, D, D)

    a = semantic_attention_sgam(
        fasttext_ocr_tokens, fasttext_object_concepts, wq, bq, wk, bk
    )
    a = jax.block_until_ready(a)

    # Pure-JAX reference (original formulation: unscaled weights, /sqrt(D) last).
    q_ref = jnp.einsum("bnd,od->bno", fasttext_ocr_tokens, wq) + bq
    k_ref = jnp.einsum("bkd,od->bko", fasttext_object_concepts, wk) + bk
    a_ref = jnp.einsum("bno,bko->bnk", q_ref, k_ref) / math.sqrt(D)

    assert a.shape == (BS, NUM_OCR, TOP_K)
    assert jnp.allclose(a, a_ref, atol=1e-4, rtol=1e-4)

    print("KERNEL_OK")
</pallas_src>

<mosaic_0001>
module attributes {stable_mosaic.version = 11 : i64} {
  func.func @_sgam_kernel(%arg0: i32, %arg1: memref<16x32xf32, #tpu.memory_space<vmem>>, %arg2: memref<256x32xf32, #tpu.memory_space<vmem>>, %arg3: memref<32x32xf32, #tpu.memory_space<vmem>>, %arg4: memref<1x32xf32, #tpu.memory_space<vmem>>, %arg5: memref<32x32xf32, #tpu.memory_space<vmem>>, %arg6: memref<1x32xf32, #tpu.memory_space<vmem>>, %arg7: memref<2x8x128xf32, #tpu.memory_space<vmem>>) attributes {dimension_semantics = [#tpu.dimension_semantics<arbitrary>], iteration_bounds = array<i64: 1>, scalar_prefetch = 0 : i64, scratch_operands = 0 : i64, tpu.core_type = #tpu.core_type<tc>, window_params = [{pipeline_mode = #tpu.pipeline_mode<synchronous>, transform_indices = @transform_0, window_bounds = array<i64: 16, 32>}, {pipeline_mode = #tpu.pipeline_mode<synchronous>, transform_indices = @transform_1, window_bounds = array<i64: 256, 32>}, {pipeline_mode = #tpu.pipeline_mode<synchronous>, transform_indices = @transform_2, window_bounds = array<i64: 32, 32>}, {pipeline_mode = #tpu.pipeline_mode<synchronous>, transform_indices = @transform_3, window_bounds = array<i64: 1, 32>}, {pipeline_mode = #tpu.pipeline_mode<synchronous>, transform_indices = @transform_4, window_bounds = array<i64: 32, 32>}, {pipeline_mode = #tpu.pipeline_mode<synchronous>, transform_indices = @transform_5, window_bounds = array<i64: 1, 32>}, {pipeline_mode = #tpu.pipeline_mode<synchronous>, transform_indices = @transform_6, window_bounds = array<i64: 2, 8, 128>}]} {
    %c0 = arith.constant 0 : index
    %c0_0 = arith.constant 0 : index
    %0 = vector.load %arg1[%c0, %c0_0] : memref<16x32xf32, #tpu.memory_space<vmem>>, vector<16x32xf32>
    %c0_1 = arith.constant 0 : index
    %c0_2 = arith.constant 0 : index
    %1 = vector.load %arg3[%c0_1, %c0_2] : memref<32x32xf32, #tpu.memory_space<vmem>>, vector<32x32xf32>
    %cst = arith.constant dense<0.000000e+00> : vector<16x32xf32>
    %2 = tpu.matmul %0, %1, %cst {dimension_numbers = #tpu.dot_dimension_numbers<[1], [0], [0], [1], [0, 0, 1, 1], [], []>} : vector<16x32xf32>, vector<32x32xf32>, vector<16x32xf32> -> vector<16x32xf32>
    %c0_3 = arith.constant 0 : index
    %c0_4 = arith.constant 0 : index
    %3 = vector.load %arg4[%c0_3, %c0_4] : memref<1x32xf32, #tpu.memory_space<vmem>>, vector<1x32xf32>
    %4 = vector.broadcast %3 : vector<1x32xf32> to vector<16x32xf32>
    %5 = arith.addf %2, %4 : vector<16x32xf32>
    %c0_5 = arith.constant 0 : index
    %c0_6 = arith.constant 0 : index
    %6 = vector.load %arg2[%c0_5, %c0_6] : memref<256x32xf32, #tpu.memory_space<vmem>>, vector<256x32xf32>
    %c0_7 = arith.constant 0 : index
    %c0_8 = arith.constant 0 : index
    %7 = vector.load %arg5[%c0_7, %c0_8] : memref<32x32xf32, #tpu.memory_space<vmem>>, vector<32x32xf32>
    %cst_9 = arith.constant dense<0.000000e+00> : vector<256x32xf32>
    %8 = tpu.matmul %6, %7, %cst_9 {dimension_numbers = #tpu.dot_dimension_numbers<[1], [0], [0], [1], [0, 0, 1, 1], [], []>} : vector<256x32xf32>, vector<32x32xf32>, vector<256x32xf32> -> vector<256x32xf32>
    %c0_10 = arith.constant 0 : index
    %c0_11 = arith.constant 0 : index
    %9 = vector.load %arg6[%c0_10, %c0_11] : memref<1x32xf32, #tpu.memory_space<vmem>>, vector<1x32xf32>
    %10 = vector.broadcast %9 : vector<1x32xf32> to vector<256x32xf32>
    %11 = arith.addf %8, %10 : vector<256x32xf32>
    %12 = vector.extract_strided_slice %5 {offsets = [0, 0], sizes = [8, 32], strides = [1, 1]} : vector<16x32xf32> to vector<8x32xf32>
    %13 = vector.extract_strided_slice %11 {offsets = [0, 0], sizes = [128, 32], strides = [1, 1]} : vector<256x32xf32> to vector<128x32xf32>
    %cst_12 = arith.constant dense<0.000000e+00> : vector<8x128xf32>
    %14 = tpu.matmul %12, %13, %cst_12 {dimension_numbers = #tpu.dot_dimension_numbers<[1], [1], [0], [0], [0, 0, 1, 0], [], []>} : vector<8x32xf32>, vector<128x32xf32>, vector<8x128xf32> -> vector<8x128xf32>
    %c0_13 = arith.constant 0 : index
    %c0_14 = arith.constant 0 : index
    %c0_15 = arith.constant 0 : index
    %15 = vector.load %arg7[%c0_13, %c0_14, %c0_15] : memref<2x8x128xf32, #tpu.memory_space<vmem>>, vector<1x8x128xf32>
    %16 = vector.shape_cast %15 : vector<1x8x128xf32> to vector<8x128xf32>
    %17 = vector.shape_cast %14 : vector<8x128xf32> to vector<1x8x128xf32>
    tpu.vector_store %arg7[%c0_13, %c0_14, %c0_15], %17 {strides = array<i32>} : memref<2x8x128xf32, #tpu.memory_space<vmem>>, vector<1x8x128xf32>,
    %18 = vector.extract_strided_slice %5 {offsets = [8, 0], sizes = [8, 32], strides = [1, 1]} : vector<16x32xf32> to vector<8x32xf32>
    %19 = vector.extract_strided_slice %11 {offsets = [128, 0], sizes = [128, 32], strides = [1, 1]} : vector<256x32xf32> to vector<128x32xf32>
    %cst_16 = arith.constant dense<0.000000e+00> : vector<8x128xf32>
    %20 = tpu.matmul %18, %19, %cst_16 {dimension_numbers = #tpu.dot_dimension_numbers<[1], [1], [0], [0], [0, 0, 1, 0], [], []>} : vector<8x32xf32>, vector<128x32xf32>, vector<8x128xf32> -> vector<8x128xf32>
    %c1 = arith.constant 1 : index
    %c0_17 = arith.constant 0 : index
    %c0_18 = arith.constant 0 : index
    %21 = vector.load %arg7[%c1, %c0_17, %c0_18] : memref<2x8x128xf32, #tpu.memory_space<vmem>>, vector<1x8x128xf32>
    %22 = vector.shape_cast %21 : vector<1x8x128xf32> to vector<8x128xf32>
    %23 = vector.shape_cast %20 : vector<8x128xf32> to vector<1x8x128xf32>
    tpu.vector_store %arg7[%c1, %c0_17, %c0_18], %23 {strides = array<i32>} : memref<2x8x128xf32, #tpu.memory_space<vmem>>, vector<1x8x128xf32>,
    return
  }
  func.func @transform_0(%arg0: i32) -> (i32, i32) {
    %c0_i32 = arith.constant 0 : i32
    %c0_i32_0 = arith.constant 0 : i32
    %c0_i32_1 = arith.constant 0 : i32
    return %c0_i32, %c0_i32_0 : i32, i32
  }
  func.func @transform_1(%arg0: i32) -> (i32, i32) {
    %c0_i32 = arith.constant 0 : i32
    %c0_i32_0 = arith.constant 0 : i32
    %c0_i32_1 = arith.constant 0 : i32
    return %c0_i32, %c0_i32_0 : i32, i32
  }
  func.func @transform_2(%arg0: i32) -> (i32, i32) {
    %c0_i32 = arith.constant 0 : i32
    %c0_i32_0 = arith.constant 0 : i32
    %c0_i32_1 = arith.constant 0 : i32
    return %c0_i32, %c0_i32_0 : i32, i32
  }
  func.func @transform_3(%arg0: i32) -> (i32, i32) {
    %c0_i32 = arith.constant 0 : i32
    %c0_i32_0 = arith.constant 0 : i32
    %c0_i32_1 = arith.constant 0 : i32
    return %c0_i32, %c0_i32_0 : i32, i32
  }
  func.func @transform_4(%arg0: i32) -> (i32, i32) {
    %c0_i32 = arith.constant 0 : i32
    %c0_i32_0 = arith.constant 0 : i32
    %c0_i32_1 = arith.constant 0 : i32
    return %c0_i32, %c0_i32_0 : i32, i32
  }
  func.func @transform_5(%arg0: i32) -> (i32, i32) {
    %c0_i32 = arith.constant 0 : i32
    %c0_i32_0 = arith.constant 0 : i32
    %c0_i32_1 = arith.constant 0 : i32
    return %c0_i32, %c0_i32_0 : i32, i32
  }
  func.func @transform_6(%arg0: i32) -> (i32, i32, i32) {
    %c0_i32 = arith.constant 0 : i32
    %c0_i32_0 = arith.constant 0 : i32
    %c0_i32_1 = arith.constant 0 : i32
    %c0_i32_2 = arith.constant 0 : i32
    return %c0_i32, %c0_i32_0, %c0_i32_1 : i32, i32, i32
  }
}

</mosaic_0001>

<llo_original>
// kernel: tpu_custom_call.1
$region0: #{tpu_custom_call.1}
  #allocation0 [shape = 'u32[]', space=smem, size = 0x4, offset = 0x4, fixed_abs, tag = 'smem constant byte address 0x4 - core index']
  #allocation1 [shape = 'u32[144,128]{1,0:T(1,128)}', space=vmem, size = 0x12000, scoped, tag = 'internal scratch']
  %s0 = inlined_call_operand.vmem [shape: f32[16,32], index: 0, kind: input, shape index: {}]
  %s1 = inlined_call_operand.vmem [shape: f32[256,32], index: 1, kind: input, shape index: {}]
  %s2 = inlined_call_operand.vmem [shape: f32[32,32], index: 2, kind: input, shape index: {}]
  %s3 = inlined_call_operand.vmem [shape: f32[1,32], index: 3, kind: input, shape index: {}]
  %s4 = inlined_call_operand.vmem [shape: f32[32,32], index: 4, kind: input, shape index: {}]
  %s5 = inlined_call_operand.vmem [shape: f32[1,32], index: 5, kind: input, shape index: {}]
  %s6 = inlined_call_operand.hbm [shape: f32[2,8,128], index: 6, kind: output, shape index: {}]
  %s7 = sld [smem:[#allocation0]]
  $region34: #{tpu_custom_call.1} parent=0
    _
  %s9 = ssub.s32 1, %s7
  %s10 = scalar_select 0, %s9, %s7
  $region1: #{tpu_custom_call.1} parent=0
    #allocation2 [shape = 'u8[8192]{0}', space=vmem, size = 0x2000, scoped, tag = 'output window, operand 0, single buffered']
    #allocation3 [shape = 's32[1]{0}', space=sflag, size = 0x4, scoped, tag = 'scoped memory for tpu_custom_call.1']
    %11 = vsyncpa [#allocation3], 0
    // Predicated region
    $region2: #{tpu_custom_call.1} parent=1 // pred_check
      _
    $region3: #{tpu_custom_call.1} parent=1 // pred_check_branch
      %13 = sbr.rel (0) target = $region5
    $region4: #{tpu_custom_call.1} parent=1 // pred_region
      _
    $region5: #{tpu_custom_call.1} parent=1 // pred_fallthru
      _
    // Predicated region
    $region6: #{tpu_custom_call.1} parent=1 // pred_check
      _
    $region7: #{tpu_custom_call.1} parent=1 // pred_check_branch
      %15 = sbr.rel (0) target = $region9
    $region8: #{tpu_custom_call.1} parent=1 // pred_region
      _
    $region9: #{tpu_custom_call.1} parent=1 // pred_fallthru
      _
    // Predicated region
    $region10: #{tpu_custom_call.1} parent=1 // pred_check
      _
    $region11: #{tpu_custom_call.1} parent=1 // pred_check_branch
      %17 = sbr.rel (0) target = $region13
    $region12: #{tpu_custom_call.1} parent=1 // pred_region
      _
    $region13: #{tpu_custom_call.1} parent=1 // pred_fallthru
      _
    // Predicated region
    $region14: #{tpu_custom_call.1} parent=1 // pred_check
      _
    $region15: #{tpu_custom_call.1} parent=1 // pred_check_branch
      %19 = sbr.rel (0) target = $region17
    $region16: #{tpu_custom_call.1} parent=1 // pred_region
      _
    $region17: #{tpu_custom_call.1} parent=1 // pred_fallthru
      _
    // Predicated region
    $region18: #{tpu_custom_call.1} parent=1 // pred_check
      _
    $region19: #{tpu_custom_call.1} parent=1 // pred_check_branch
      %21 = sbr.rel (0) target = $region21
    $region20: #{tpu_custom_call.1} parent=1 // pred_region
      _
    $region21: #{tpu_custom_call.1} parent=1 // pred_fallthru
      _
    // Predicated region
    $region22: #{tpu_custom_call.1} parent=1 // pred_check
      _
    $region23: #{tpu_custom_call.1} parent=1 // pred_check_branch
      %23 = sbr.rel (0) target = $region25
    $region24: #{tpu_custom_call.1} parent=1 // pred_region
      _
    $region25: #{tpu_custom_call.1} parent=1 // pred_fallthru
      _
    %v24 = vld [vmem:[%s0] sm:$0xff]
    %v25 = vld [vmem:[%s0 + $0x8] sm:$0xff]
    %v26 = vld [vmem:[%s2] sm:$0xff]
    %v27 = vld [vmem:[%s2 + $0x8] sm:$0xff]
    %v28 = vld [vmem:[%s2 + $0x10] sm:$0xff]
    %v29 = vld [vmem:[%s2 + $0x18] sm:$0xff]
    %v30 = vld [vmem:[%s3] sm:$0x1]
    %v32 = vlaneseq
    %v33 = vshrl.u32 %v32, 7
    %v34 = vsub.s32 0, %v33
    %v35 = vrot.slane %v30, %v34
    %vm37 = vcmask 261120
    %v39 = vsel %vm37, %v24, 0
    %v42 = vsel %vm37, %v25, 0
    %44 = vmatprep.subr.mxu0 0.0
    %45 = vmatpush1.msra.mxu0 %v26
    %46 = vmatprep.subr.mxu0 0.0
    %47 = vmatpush1.msra.mxu0 %v27
    %48 = vmatprep.subr.mxu0 0.0
    %49 = vmatpush1.msra.mxu0 %v28
    %50 = vmatprep.subr.mxu0 0.0
    %51 = vmatpush1.msra.mxu0 %v29
    %52 = vmatprep.subr.mxu0 0.0
    %53 = vmatpush1.msra.mxu0 0.0
    %54 = vmatprep.subr.mxu0 0.0
    %55 = vmatpush1.msra.mxu0 0.0
    %56 = vmatprep.subr.mxu0 0.0
    %57 = vmatpush1.msra.mxu0 0.0
    %58 = vmatprep.subr.mxu0 0.0
    %59 = vmatpush1.msra.mxu0 0.0
    %60 = vmatprep.subr.mxu0 0.0
    %61 = vmatpush1.msra.mxu0 0.0
    %62 = vmatprep.subr.mxu0 0.0
    %63 = vmatpush1.msra.mxu0 0.0
    %64 = vmatprep.subr.mxu0 0.0
    %65 = vmatpush1.msra.mxu0 0.0
    %66 = vmatprep.subr.mxu0 0.0
    %67 = vmatpush1.msra.mxu0 0.0
    %68 = vmatprep.subr.mxu0 0.0
    %69 = vmatpush1.msra.mxu0 0.0
    %70 = vmatprep.subr.mxu0 0.0
    %71 = vmatpush1.msra.mxu0 0.0
    %72 = vmatprep.subr.mxu0 0.0
    %73 = vmatpush1.msra.mxu0 0.0
    %74 = vmatprep.subr.mxu0 0.0
    %75 = vmatpush1.msra.mxu0 0.0
    %76 = vmatprep.subr.mxu0 0.0
    %77 = vmatpush1.msra.mxu0 0.0
    %78 = vmatprep.subr.mxu0 0.0
    %79 = vmatpush1.msra.mxu0 0.0
    %80 = vmatprep.subr.mxu0 0.0
    %81 = vmatpush1.msra.mxu0 0.0
    %82 = vmatprep.subr.mxu0 0.0
    %83 = vmatpush1.msra.mxu0 0.0
    %84 = vmatprep.subr.mxu0 0.0
    %85 = vmatpush1.msra.mxu0 0.0
    %86 = vmatprep.subr.mxu0 0.0
    %87 = vmatpush1.msra.mxu0 0.0
    %88 = vmatprep.subr.mxu0 0.0
    %89 = vmatpush1.msra.mxu0 0.0
    %90 = vmatprep.subr.mxu0 0.0
    %91 = vmatpush1.msra.mxu0 0.0
    %92 = vmatprep.subr.mxu0 0.0
    %93 = vmatpush1.msra.mxu0 0.0
    %94 = vmatprep.subr.mxu0 0.0
    %95 = vmatpush1.msra.mxu0 0.0
    %96 = vmatprep.subr.mxu0 0.0
    %97 = vmatpush1.msra.mxu0 0.0
    %98 = vmatprep.subr.mxu0 0.0
    %99 = vmatpush1.msra.mxu0 0.0
    %100 = vmatprep.subr.mxu0 0.0
    %101 = vmatpush1.msra.mxu0 0.0
    %102 = vmatprep.subr.mxu0 0.0
    %103 = vmatpush1.msra.mxu0 0.0
    %104 = vmatprep.subr.mxu0 0.0
    %105 = vmatpush1.msra.mxu0 0.0
    %106 = vmatprep.subr.mxu0 0.0
    %107 = vmatpush1.msra.mxu0 0.0
    %108 = vmatprep.mubr.f32.mxu0 0.0
    %109 = vmatmul.mubr.f32.gmra.mrb[0].mxu0 %v39
    %v110 = vpop.f32.mrb[0].mxu0
    %v111 = vadd.f32 %v35, %v110
    %v112 = vpop.f32.mrb[0].mxu0
    %113 = vmatprep.mubr.f32.mxu0 0.0
    %114 = vmatmul.mubr.f32.gmra.mrb[0].mxu0 %v42
    %v115 = vpop.f32.mrb[0].mxu0
    %v116 = vadd.f32 %v35, %v115
    %v117 = vpop.f32.mrb[0].mxu0
    %118 = vdwg.mxu0
    %v119 = vld [vmem:[%s1] sm:$0xff]
    %v120 = vld [vmem:[%s1 + $0x8] sm:$0xff]
    %v121 = vld [vmem:[%s1 + $0x10] sm:$0xff]
    %v122 = vld [vmem:[%s1 + $0x18] sm:$0xff]
    %v123 = vld [vmem:[%s1 + $0x20] sm:$0xff]
    %v124 = vld [vmem:[%s1 + $0x28] sm:$0xff]
    %v125 = vld [vmem:[%s1 + $0x30] sm:$0xff]
    %v126 = vld [vmem:[%s1 + $0x38] sm:$0xff]
    %v127 = vld [vmem:[%s1 + $0x40] sm:$0xff]
    %v128 = vld [vmem:[%s1 + $0x48] sm:$0xff]
    %v129 = vld [vmem:[%s1 + $0x50] sm:$0xff]
    %v130 = vld [vmem:[%s1 + $0x58] sm:$0xff]
    %v131 = vld [vmem:[%s1 + $0x60] sm:$0xff]
    %v132 = vld [vmem:[%s1 + $0x68] sm:$0xff]
    %v133 = vld [vmem:[%s1 + $0x70] sm:$0xff]
    %v134 = vld [vmem:[%s1 + $0x78] sm:$0xff]
    %v135 = vld [vmem:[%s1 + $0x80] sm:$0xff]
    %v136 = vld [vmem:[%s1 + $0x88] sm:$0xff]
    %v137 = vld [vmem:[%s1 + $0x90] sm:$0xff]
    %v138 = vld [vmem:[%s1 + $0x98] sm:$0xff]
    %v139 = vld [vmem:[%s1 + $0xa0] sm:$0xff]
    %v140 = vld [vmem:[%s1 + $0xa8] sm:$0xff]
    %v141 = vld [vmem:[%s1 + $0xb0] sm:$0xff]
    %v142 = vld [vmem:[%s1 + $0xb8] sm:$0xff]
    %v143 = vld [vmem:[%s1 + $0xc0] sm:$0xff]
    %v144 = vld [vmem:[%s1 + $0xc8] sm:$0xff]
    %v145 = vld [vmem:[%s1 + $0xd0] sm:$0xff]
    %v146 = vld [vmem:[%s1 + $0xd8] sm:$0xff]
    %v147 = vld [vmem:[%s1 + $0xe0] sm:$0xff]
    %v148 = vld [vmem:[%s1 + $0xe8] sm:$0xff]
    %v149 = vld [vmem:[%s1 + $0xf0] sm:$0xff]
    %v150 = vld [vmem:[%s1 + $0xf8] sm:$0xff]
    %v151 = vld [vmem:[%s4] sm:$0xff]
    %v152 = vld [vmem:[%s4 + $0x8] sm:$0xff]
    %v153 = vld [vmem:[%s4 + $0x10] sm:$0xff]
    %v154 = vld [vmem:[%s4 + $0x18] sm:$0xff]
    %v155 = vld [vmem:[%s5] sm:$0x1]
    %v157 = vlaneseq
    %v158 = vshrl.u32 %v157, 7
    %v159 = vsub.s32 0, %v158
    %v160 = vrot.slane %v155, %v159
    %v163 = vsel %vm37, %v119, 0
    %v166 = vsel %vm37, %v120, 0
    %v169 = vsel %vm37, %v121, 0
    %v172 = vsel %vm37, %v122, 0
    %v175 = vsel %vm37, %v123, 0
    %v178 = vsel %vm37, %v124, 0
    %v181 = vsel %vm37, %v125, 0
    %v184 = vsel %vm37, %v126, 0
    %v187 = vsel %vm37, %v127, 0
    %v190 = vsel %vm37, %v128, 0
    %v193 = vsel %vm37, %v129, 0
    %v196 = vsel %vm37, %v130, 0
    %v199 = vsel %vm37, %v131, 0
    %v202 = vsel %vm37, %v132, 0
    %v205 = vsel %vm37, %v133, 0
    %v208 = vsel %vm37, %v134, 0
    %v211 = vsel %vm37, %v135, 0
    %v214 = vsel %vm37, %v136, 0
    %v217 = vsel %vm37, %v137, 0
    %v220 = vsel %vm37, %v138, 0
    %v223 = vsel %vm37, %v139, 0
    %v226 = vsel %vm37, %v140, 0
    %v229 = vsel %vm37, %v141, 0
    %v232 = vsel %vm37, %v142, 0
    %v235 = vsel %vm37, %v143, 0
    %v238 = vsel %vm37, %v144, 0
    %v241 = vsel %vm37, %v145, 0
    %v244 = vsel %vm37, %v146, 0
    %v247 = vsel %vm37, %v147, 0
    %v250 = vsel %vm37, %v148, 0
    %v253 = vsel %vm37, %v149, 0
    %v256 = vsel %vm37, %v150, 0
    %258 = vmatprep.subr.mxu0 0.0
    %259 = vmatpush1.msra.mxu0 %v151
    %260 = vmatprep.subr.mxu0 0.0
    %261 = vmatpush1.msra.mxu0 %v152
    %262 = vmatprep.subr.mxu0 0.0
    %263 = vmatpush1.msra.mxu0 %v153
    %264 = vmatprep.subr.mxu0 0.0
    %265 = vmatpush1.msra.mxu0 %v154
    %266 = vmatprep.subr.mxu0 0.0
    %267 = vmatpush1.msra.mxu0 0.0
    %268 = vmatprep.subr.mxu0 0.0
    %269 = vmatpush1.msra.mxu0 0.0
    %270 = vmatprep.subr.mxu0 0.0
    %271 = vmatpush1.msra.mxu0 0.0
    %272 = vmatprep.subr.mxu0 0.0
    %273 = vmatpush1.msra.mxu0 0.0
    %274 = vmatprep.subr.mxu0 0.0
    %275 = vmatpush1.msra.mxu0 0.0
    %276 = vmatprep.subr.mxu0 0.0
    %277 = vmatpush1.msra.mxu0 0.0
    %278 = vmatprep.subr.mxu0 0.0
    %279 = vmatpush1.msra.mxu0 0.0
    %280 = vmatprep.subr.mxu0 0.0
    %281 = vmatpush1.msra.mxu0 0.0
    %282 = vmatprep.subr.mxu0 0.0
    %283 = vmatpush1.msra.mxu0 0.0
    %284 = vmatprep.subr.mxu0 0.0
    %285 = vmatpush1.msra.mxu0 0.0
    %286 = vmatprep.subr.mxu0 0.0
    %287 = vmatpush1.msra.mxu0 0.0
    %288 = vmatprep.subr.mxu0 0.0
    %289 = vmatpush1.msra.mxu0 0.0
    %290 = vmatprep.subr.mxu0 0.0
    %291 = vmatpush1.msra.mxu0 0.0
    %292 = vmatprep.subr.mxu0 0.0
    %293 = vmatpush1.msra.mxu0 0.0
    %294 = vmatprep.subr.mxu0 0.0
    %295 = vmatpush1.msra.mxu0 0.0
    %296 = vmatprep.subr.mxu0 0.0
    %297 = vmatpush1.msra.mxu0 0.0
    %298 = vmatprep.subr.mxu0 0.0
    %299 = vmatpush1.msra.mxu0 0.0
    %300 = vmatprep.subr.mxu0 0.0
    %301 = vmatpush1.msra.mxu0 0.0
    %302 = vmatprep.subr.mxu0 0.0
    %303 = vmatpush1.msra.mxu0 0.0
    %304 = vmatprep.subr.mxu0 0.0
    %305 = vmatpush1.msra.mxu0 0.0
    %306 = vmatprep.subr.mxu0 0.0
    %307 = vmatpush1.msra.mxu0 0.0
    %308 = vmatprep.subr.mxu0 0.0
    %309 = vmatpush1.msra.mxu0 0.0
    %310 = vmatprep.subr.mxu0 0.0
    %311 = vmatpush1.msra.mxu0 0.0
    %312 = vmatprep.subr.mxu0 0.0
    %313 = vmatpush1.msra.mxu0 0.0
    %314 = vmatprep.subr.mxu0 0.0
    %315 = vmatpush1.msra.mxu0 0.0
    %316 = vmatprep.subr.mxu0 0.0
    %317 = vmatpush1.msra.mxu0 0.0
    %318 = vmatprep.subr.mxu0 0.0
    %319 = vmatpush1.msra.mxu0 0.0
    %320 = vmatprep.subr.mxu0 0.0
    %321 = vmatpush1.msra.mxu0 0.0
    %322 = vmatprep.mubr.f32.mxu0 0.0
    %323 = vmatmul.mubr.f32.gmra.mrb[0].mxu0 %v163
    %v324 = vpop.f32.mrb[0].mxu0
    %v325 = vadd.f32 %v160, %v324
    %v326 = vpop.f32.mrb[0].mxu0
    %327 = vmatprep.mubr.f32.mxu0 0.0
    %328 = vmatmul.mubr.f32.gmra.mrb[0].mxu0 %v166
    %v329 = vpop.f32.mrb[0].mxu0
    %v330 = vadd.f32 %v160, %v329
    %v331 = vpop.f32.mrb[0].mxu0
    %332 = vmatprep.mubr.f32.mxu0 0.0
    %333 = vmatmul.mubr.f32.gmra.mrb[0].mxu0 %v169
    %v334 = vpop.f32.mrb[0].mxu0
    %v335 = vadd.f32 %v160, %v334
    %v336 = vpop.f32.mrb[0].mxu0
    %337 = vmatprep.mubr.f32.mxu0 0.0
    %338 = vmatmul.mubr.f32.gmra.mrb[0].mxu0 %v172
    %v339 = vpop.f32.mrb[0].mxu0
    %v340 = vadd.f32 %v160, %v339
    %v341 = vpop.f32.mrb[0].mxu0
    %342 = vmatprep.mubr.f32.mxu0 0.0
    %343 = vmatmul.mubr.f32.gmra.mrb[0].mxu0 %v175
    %v344 = vpop.f32.mrb[0].mxu0
    %v345 = vadd.f32 %v160, %v344
    %v346 = vpop.f32.mrb[0].mxu0
    %347 = vmatprep.mubr.f32.mxu0 0.0
    %348 = vmatmul.mubr.f32.gmra.mrb[0].mxu0 %v178
    %v349 = vpop.f32.mrb[0].mxu0
    %v350 = vadd.f32 %v160, %v349
    %v351 = vpop.f32.mrb[0].mxu0
    %352 = vmatprep.mubr.f32.mxu0 0.0
    %353 = vmatmul.mubr.f32.gmra.mrb[0].mxu0 %v181
    %v354 = vpop.f32.mrb[0].mxu0
    %v355 = vadd.f32 %v160, %v354
    %v356 = vpop.f32.mrb[0].mxu0
    %357 = vmatprep.mubr.f32.mxu0 0.0
    %358 = vmatmul.mubr.f32.gmra.mrb[0].mxu0 %v184
    %v359 = vpop.f32.mrb[0].mxu0
    %v360 = vadd.f32 %v160, %v359
    %v361 = vpop.f32.mrb[0].mxu0
    %362 = vmatprep.mubr.f32.mxu0 0.0
    %363 = vmatmul.mubr.f32.gmra.mrb[0].mxu0 %v187
    %v364 = vpop.f32.mrb[0].mxu0
    %v365 = vadd.f32 %v160, %v364
    %v366 = vpop.f32.mrb[0].mxu0
    %367 = vmatprep.mubr.f32.mxu0 0.0
    %368 = vmatmul.mubr.f32.gmra.mrb[0].mxu0 %v190
    %v369 = vpop.f32.mrb[0].mxu0
    %v370 = vadd.f32 %v160, %v369
    %v371 = vpop.f32.mrb[0].mxu0
    %372 = vmatprep.mubr.f32.mxu0 0.0
    %373 = vmatmul.mubr.f32.gmra.mrb[0].mxu0 %v193
    %v374 = vpop.f32.mrb[0].mxu0
    %v375 = vadd.f32 %v160, %v374
    %v376 = vpop.f32.mrb[0].mxu0
    %377 = vmatprep.mubr.f32.mxu0 0.0
    %378 = vmatmul.mubr.f32.gmra.mrb[0].mxu0 %v196
    %v379 = vpop.f32.mrb[0].mxu0
    %v380 = vadd.f32 %v160, %v379
    %v381 = vpop.f32.mrb[0].mxu0
    %382 = vmatprep.mubr.f32.mxu0 0.0
    %383 = vmatmul.mubr.f32.gmra.mrb[0].mxu0 %v199
    %v384 = vpop.f32.mrb[0].mxu0
    %v385 = vadd.f32 %v160, %v384
    %v386 = vpop.f32.mrb[0].mxu0
    %387 = vmatprep.mubr.f32.mxu0 0.0
    %388 = vmatmul.mubr.f32.gmra.mrb[0].mxu0 %v202
    %v389 = vpop.f32.mrb[0].mxu0
    %v390 = vadd.f32 %v160, %v389
    %v391 = vpop.f32.mrb[0].mxu0
    %392 = vmatprep.mubr.f32.mxu0 0.0
    %393 = vmatmul.mubr.f32.gmra.mrb[0].mxu0 %v205
    %v394 = vpop.f32.mrb[0].mxu0
    %v395 = vadd.f32 %v160, %v394
    %v396 = vpop.f32.mrb[0].mxu0
    %397 = vmatprep.mubr.f32.mxu0 0.0
    %398 = vmatmul.mubr.f32.gmra.mrb[0].mxu0 %v208
    %v399 = vpop.f32.mrb[0].mxu0
    %v400 = vadd.f32 %v160, %v399
    %v401 = vpop.f32.mrb[0].mxu0
    %402 = vmatprep.mubr.f32.mxu0 0.0
    %403 = vmatmul.mubr.f32.gmra.mrb[0].mxu0 %v211
    %v404 = vpop.f32.mrb[0].mxu0
    %v405 = vadd.f32 %v160, %v404
    %v406 = vpop.f32.mrb[0].mxu0
    %407 = vmatprep.mubr.f32.mxu0 0.0
    %408 = vmatmul.mubr.f32.gmra.mrb[0].mxu0 %v214
    %v409 = vpop.f32.mrb[0].mxu0
    %v410 = vadd.f32 %v160, %v409
    %v411 = vpop.f32.mrb[0].mxu0
    %412 = vmatprep.mubr.f32.mxu0 0.0
    %413 = vmatmul.mubr.f32.gmra.mrb[0].mxu0 %v217
    %v414 = vpop.f32.mrb[0].mxu0
    %v415 = vadd.f32 %v160, %v414
    %v416 = vpop.f32.mrb[0].mxu0
    %417 = vmatprep.mubr.f32.mxu0 0.0
    %418 = vmatmul.mubr.f32.gmra.mrb[0].mxu0 %v220
    %v419 = vpop.f32.mrb[0].mxu0
    %v420 = vadd.f32 %v160, %v419
    %v421 = vpop.f32.mrb[0].mxu0
    %422 = vmatprep.mubr.f32.mxu0 0.0
    %423 = vmatmul.mubr.f32.gmra.mrb[0].mxu0 %v223
    %v424 = vpop.f32.mrb[0].mxu0
    %v425 = vadd.f32 %v160, %v424
    %v426 = vpop.f32.mrb[0].mxu0
    %427 = vmatprep.mubr.f32.mxu0 0.0
    %428 = vmatmul.mubr.f32.gmra.mrb[0].mxu0 %v226
    %v429 = vpop.f32.mrb[0].mxu0
    %v430 = vadd.f32 %v160, %v429
    %v431 = vpop.f32.mrb[0].mxu0
    %432 = vmatprep.mubr.f32.mxu0 0.0
    %433 = vmatmul.mubr.f32.gmra.mrb[0].mxu0 %v229
    %v434 = vpop.f32.mrb[0].mxu0
    %v435 = vadd.f32 %v160, %v434
    %v436 = vpop.f32.mrb[0].mxu0
    %437 = vmatprep.mubr.f32.mxu0 0.0
    %438 = vmatmul.mubr.f32.gmra.mrb[0].mxu0 %v232
    %v439 = vpop.f32.mrb[0].mxu0
    %v440 = vadd.f32 %v160, %v439
    %v441 = vpop.f32.mrb[0].mxu0
    %442 = vmatprep.mubr.f32.mxu0 0.0
    %443 = vmatmul.mubr.f32.gmra.mrb[0].mxu0 %v235
    %v444 = vpop.f32.mrb[0].mxu0
    %v445 = vadd.f32 %v160, %v444
    %v446 = vpop.f32.mrb[0].mxu0
    %447 = vmatprep.mubr.f32.mxu0 0.0
    %448 = vmatmul.mubr.f32.gmra.mrb[0].mxu0 %v238
    %v449 = vpop.f32.mrb[0].mxu0
    %v450 = vadd.f32 %v160, %v449
    %v451 = vpop.f32.mrb[0].mxu0
    %452 = vmatprep.mubr.f32.mxu0 0.0
    %453 = vmatmul.mubr.f32.gmra.mrb[0].mxu0 %v241
    %v454 = vpop.f32.mrb[0].mxu0
    %v455 = vadd.f32 %v160, %v454
    %v456 = vpop.f32.mrb[0].mxu0
    %457 = vmatprep.mubr.f32.mxu0 0.0
    %458 = vmatmul.mubr.f32.gmra.mrb[0].mxu0 %v244
    %v459 = vpop.f32.mrb[0].mxu0
    %v460 = vadd.f32 %v160, %v459
    %v461 = vpop.f32.mrb[0].mxu0
    %462 = vmatprep.mubr.f32.mxu0 0.0
    %463 = vmatmul.mubr.f32.gmra.mrb[0].mxu0 %v247
    %v464 = vpop.f32.mrb[0].mxu0
    %v465 = vadd.f32 %v160, %v464
    %v466 = vpop.f32.mrb[0].mxu0
    %467 = vmatprep.mubr.f32.mxu0 0.0
    %468 = vmatmul.mubr.f32.gmra.mrb[0].mxu0 %v250
    %v469 = vpop.f32.mrb[0].mxu0
    %v470 = vadd.f32 %v160, %v469
    %v471 = vpop.f32.mrb[0].mxu0
    %472 = vmatprep.mubr.f32.mxu0 0.0
    %473 = vmatmul.mubr.f32.gmra.mrb[0].mxu0 %v253
    %v474 = vpop.f32.mrb[0].mxu0
    %v475 = vadd.f32 %v160, %v474
    %v476 = vpop.f32.mrb[0].mxu0
    %477 = vmatprep.mubr.f32.mxu0 0.0
    %478 = vmatmul.mubr.f32.gmra.mrb[0].mxu0 %v256
    %v479 = vpop.f32.mrb[0].mxu0
    %v480 = vadd.f32 %v160, %v479
    %v481 = vpop.f32.mrb[0].mxu0
    %482 = vdwg.mxu0
    %v484 = vsel %vm37, %v111, 0
    %v487 = vsel %vm37, %v325, 0
    %v490 = vsel %vm37, %v330, 0
    %v493 = vsel %vm37, %v335, 0
    %v496 = vsel %vm37, %v340, 0
    %v499 = vsel %vm37, %v345, 0
    %v502 = vsel %vm37, %v350, 0
    %v505 = vsel %vm37, %v355, 0
    %v508 = vsel %vm37, %v360, 0
    %v511 = vsel %vm37, %v365, 0
    %v514 = vsel %vm37, %v370, 0
    %v517 = vsel %vm37, %v375, 0
    %v520 = vsel %vm37, %v380, 0
    %v523 = vsel %vm37, %v385, 0
    %v526 = vsel %vm37, %v390, 0
    %v529 = vsel %vm37, %v395, 0
    %v532 = vsel %vm37, %v400, 0
    %534 = vmatprep.subr.mxu0 0.0
    %535 = vmatpush1.xpose.msra.mxu0 %v487
    %536 = vmatprep.subr.mxu0 0.0
    %537 = vmatpush1.xpose.msra.mxu0 %v490
    %538 = vmatprep.subr.mxu0 0.0
    %539 = vmatpush1.xpose.msra.mxu0 %v493
    %540 = vmatprep.subr.mxu0 0.0
    %541 = vmatpush1.xpose.msra.mxu0 %v496
    %542 = vmatprep.subr.mxu0 0.0
    %543 = vmatpush1.xpose.msra.mxu0 %v499
    %544 = vmatprep.subr.mxu0 0.0
    %545 = vmatpush1.xpose.msra.mxu0 %v502
    %546 = vmatprep.subr.mxu0 0.0
    %547 = vmatpush1.xpose.msra.mxu0 %v505
    %548 = vmatprep.subr.mxu0 0.0
    %549 = vmatpush1.xpose.msra.mxu0 %v508
    %550 = vmatprep.subr.mxu0 0.0
    %551 = vmatpush1.xpose.msra.mxu0 %v511
    %552 = vmatprep.subr.mxu0 0.0
    %553 = vmatpush1.xpose.msra.mxu0 %v514
    %554 = vmatprep.subr.mxu0 0.0
    %555 = vmatpush1.xpose.msra.mxu0 %v517
    %556 = vmatprep.subr.mxu0 0.0
    %557 = vmatpush1.xpose.msra.mxu0 %v520
    %558 = vmatprep.subr.mxu0 0.0
    %559 = vmatpush1.xpose.msra.mxu0 %v523
    %560 = vmatprep.subr.mxu0 0.0
    %561 = vmatpush1.xpose.msra.mxu0 %v526
    %562 = vmatprep.subr.mxu0 0.0
    %563 = vmatpush1.xpose.msra.mxu0 %v529
    %564 = vmatprep.subr.mxu0 0.0
    %565 = vmatpush1.xpose.msra.mxu0 %v532
    %566 = vmatprep.subr.mxu0 0.0
    %567 = vmatpush1.xpose.msra.mxu0 0.0
    %568 = vmatprep.subr.mxu0 0.0
    %569 = vmatpush1.xpose.msra.mxu0 0.0
    %570 = vmatprep.subr.mxu0 0.0
    %571 = vmatpush1.xpose.msra.mxu0 0.0
    %572 = vmatprep.subr.mxu0 0.0
    %573 = vmatpush1.xpose.msra.mxu0 0.0
    %574 = vmatprep.subr.mxu0 0.0
    %575 = vmatpush1.xpose.msra.mxu0 0.0
    %576 = vmatprep.subr.mxu0 0.0
    %577 = vmatpush1.xpose.msra.mxu0 0.0
    %578 = vmatprep.subr.mxu0 0.0
    %579 = vmatpush1.xpose.msra.mxu0 0.0
    %580 = vmatprep.subr.mxu0 0.0
    %581 = vmatpush1.xpose.msra.mxu0 0.0
    %582 = vmatprep.subr.mxu0 0.0
    %583 = vmatpush1.xpose.msra.mxu0 0.0
    %584 = vmatprep.subr.mxu0 0.0
    %585 = vmatpush1.xpose.msra.mxu0 0.0
    %586 = vmatprep.subr.mxu0 0.0
    %587 = vmatpush1.xpose.msra.mxu0 0.0
    %588 = vmatprep.subr.mxu0 0.0
    %589 = vmatpush1.xpose.msra.mxu0 0.0
    %590 = vmatprep.subr.mxu0 0.0
    %591 = vmatpush1.xpose.msra.mxu0 0.0
    %592 = vmatprep.subr.mxu0 0.0
    %593 = vmatpush1.xpose.msra.mxu0 0.0
    %594 = vmatprep.subr.mxu0 0.0
    %595 = vmatpush1.xpose.msra.mxu0 0.0
    %596 = vmatprep.subr.mxu0 0.0
    %597 = vmatpush1.xpose.msra.mxu0 0.0
    %598 = vmatprep.mubr.f32.mxu0 0.0
    %599 = vmatmul.mubr.f32.gmra.mrb[0].mxu0 %v484
    %v600 = vpop.f32.mrb[0].mxu0
    %v601 = vadd.f32 0.0, %v600
    %v602 = vpop.f32.mrb[0].mxu0
    %603 = vdwg.mxu0
    %604 = vst [vmem:[#allocation2] sm:$0xff] %v601
    %v606 = vsel %vm37, %v116, 0
    %v609 = vsel %vm37, %v405, 0
    %v612 = vsel %vm37, %v410, 0
    %v615 = vsel %vm37, %v415, 0
    %v618 = vsel %vm37, %v420, 0
    %v621 = vsel %vm37, %v425, 0
    %v624 = vsel %vm37, %v430, 0
    %v627 = vsel %vm37, %v435, 0
    %v630 = vsel %vm37, %v440, 0
    %v633 = vsel %vm37, %v445, 0
    %v636 = vsel %vm37, %v450, 0
    %v639 = vsel %vm37, %v455, 0
    %v642 = vsel %vm37, %v460, 0
    %v645 = vsel %vm37, %v465, 0
    %v648 = vsel %vm37, %v470, 0
    %v651 = vsel %vm37, %v475, 0
    %v654 = vsel %vm37, %v480, 0
    %656 = vmatprep.subr.mxu0 0.0
    %657 = vmatpush1.xpose.msra.mxu0 %v609
    %658 = vmatprep.subr.mxu0 0.0
    %659 = vmatpush1.xpose.msra.mxu0 %v612
    %660 = vmatprep.subr.mxu0 0.0
    %661 = vmatpush1.xpose.msra.mxu0 %v615
    %662 = vmatprep.subr.mxu0 0.0
    %663 = vmatpush1.xpose.msra.mxu0 %v618
    %664 = vmatprep.subr.mxu0 0.0
    %665 = vmatpush1.xpose.msra.mxu0 %v621
    %666 = vmatprep.subr.mxu0 0.0
    %667 = vmatpush1.xpose.msra.mxu0 %v624
    %668 = vmatprep.subr.mxu0 0.0
    %669 = vmatpush1.xpose.msra.mxu0 %v627
    %670 = vmatprep.subr.mxu0 0.0
    %671 = vmatpush1.xpose.msra.mxu0 %v630
    %672 = vmatprep.subr.mxu0 0.0
    %673 = vmatpush1.xpose.msra.mxu0 %v633
    %674 = vmatprep.subr.mxu0 0.0
    %675 = vmatpush1.xpose.msra.mxu0 %v636
    %676 = vmatprep.subr.mxu0 0.0
    %677 = vmatpush1.xpose.msra.mxu0 %v639
    %678 = vmatprep.subr.mxu0 0.0
    %679 = vmatpush1.xpose.msra.mxu0 %v642
    %680 = vmatprep.subr.mxu0 0.0
    %681 = vmatpush1.xpose.msra.mxu0 %v645
    %682 = vmatprep.subr.mxu0 0.0
    %683 = vmatpush1.xpose.msra.mxu0 %v648
    %684 = vmatprep.subr.mxu0 0.0
    %685 = vmatpush1.xpose.msra.mxu0 %v651
    %686 = vmatprep.subr.mxu0 0.0
    %687 = vmatpush1.xpose.msra.mxu0 %v654
    %688 = vmatprep.subr.mxu0 0.0
    %689 = vmatpush1.xpose.msra.mxu0 0.0
    %690 = vmatprep.subr.mxu0 0.0
    %691 = vmatpush1.xpose.msra.mxu0 0.0
    %692 = vmatprep.subr.mxu0 0.0
    %693 = vmatpush1.xpose.msra.mxu0 0.0
    %694 = vmatprep.subr.mxu0 0.0
    %695 = vmatpush1.xpose.msra.mxu0 0.0
    %696 = vmatprep.subr.mxu0 0.0
    %697 = vmatpush1.xpose.msra.mxu0 0.0
    %698 = vmatprep.subr.mxu0 0.0
    %699 = vmatpush1.xpose.msra.mxu0 0.0
    %700 = vmatprep.subr.mxu0 0.0
    %701 = vmatpush1.xpose.msra.mxu0 0.0
    %702 = vmatprep.subr.mxu0 0.0
    %703 = vmatpush1.xpose.msra.mxu0 0.0
    %704 = vmatprep.subr.mxu0 0.0
    %705 = vmatpush1.xpose.msra.mxu0 0.0
    %706 = vmatprep.subr.mxu0 0.0
    %707 = vmatpush1.xpose.msra.mxu0 0.0
    %708 = vmatprep.subr.mxu0 0.0
    %709 = vmatpush1.xpose.msra.mxu0 0.0
    %710 = vmatprep.subr.mxu0 0.0
    %711 = vmatpush1.xpose.msra.mxu0 0.0
    %712 = vmatprep.subr.mxu0 0.0
    %713 = vmatpush1.xpose.msra.mxu0 0.0
    %714 = vmatprep.subr.mxu0 0.0
    %715 = vmatpush1.xpose.msra.mxu0 0.0
    %716 = vmatprep.subr.mxu0 0.0
    %717 = vmatpush1.xpose.msra.mxu0 0.0
    %718 = vmatprep.subr.mxu0 0.0
    %719 = vmatpush1.xpose.msra.mxu0 0.0
    %720 = vmatprep.mubr.f32.mxu0 0.0
    %721 = vmatmul.mubr.f32.gmra.mrb[0].mxu0 %v606
    %v722 = vpop.f32.mrb[0].mxu0
    %v723 = vadd.f32 0.0, %v722
    %v724 = vpop.f32.mrb[0].mxu0
    %725 = vdwg.mxu0
    %s726 = scalar_lea.vmem [#allocation2], 8
    %727 = vst [vmem:[%s726] sm:$0xff] %v723
    // Predicated region
    $region26: #{tpu_custom_call.1} parent=1 // pred_check
      _
    $region27: #{tpu_custom_call.1} parent=1 // pred_check_branch
      %729 = sbr.rel (0) target = $region29
    $region28: #{tpu_custom_call.1} parent=1 // pred_region
      %s731 = ssub.s32 256, 256
      %732 = vsyncadd [#allocation3], %s731
      %s733 = sshll.u32 [#allocation2], 4
      %s734 = int_to_ptr.vmem [resolvable:$true] %s733
      %739 = dma.vmem_to_hbm [thread:$0]  %s734, 256, %s6, [#allocation3], 128, 128, 8
    $region29: #{tpu_custom_call.1} parent=1 // pred_fallthru
      _
    // Predicated region
    $region30: #{tpu_custom_call.1} parent=1 // pred_check
      _
    $region31: #{tpu_custom_call.1} parent=1 // pred_check_branch
      %741 = sbr.rel (0) target = $region33
    $region32: #{tpu_custom_call.1} parent=1 // pred_region
      %742 = dma.done [#allocation3], 256
    $region33: #{tpu_custom_call.1} parent=1 // pred_fallthru
      _
    %743 = vsyncpa [#allocation3], 1

</llo_original>
